<compile_context>
chip_gen: v7x
topology: tpu7x:2x2x1
jax: 0.10.0
libtpu: 0.0.40
codegen_flags: <defaults>
</compile_context>

<pallas_src>
import jax
import jax.numpy as jnp
from jax.experimental import pallas as pl
from jax.experimental.pallas import tpu as pltpu


def _round_up(x, m):
    return ((x + m - 1) // m) * m


def _pick_tile(dim, candidates):
    """Largest candidate tile that evenly divides dim, else the full dim."""
    for c in candidates:
        if dim >= c and dim % c == 0:
            return c
    return dim


# --------------------- tiled matmul + fused bias epilogue ----------------------
def _matmul_bias_kernel(a_ref, b_ref, bias_ref, o_ref):
    k = pl.program_id(2)

    @pl.when(k == 0)
    def _():
        o_ref[...] = jnp.zeros_like(o_ref)

    # accumulate directly into the resident output block (index_map (i,j) is
    # constant over k) -> no acc scratch, no final copy
    o_ref[...] += jnp.dot(a_ref[...], b_ref[...],
                          preferred_element_type=jnp.float32)

    @pl.when(k == pl.num_programs(2) - 1)
    def _():
        o_ref[...] += bias_ref[...]          # (1, tn) broadcast over (tm, tn)


def pallas_matmul_bias(a, b, bias):
    """a: (M, K) f32, b: (K, N) f32, bias: (1, N) f32 -> (M, N) f32.

    No padding here: caller provides lane/sublane-friendly M and N (weights are
    padded once at param-prep time); K may be arbitrary (full-K block fallback).
    """
    M, K = a.shape
    K2, N = b.shape
    assert K == K2 and bias.shape == (1, N)
    tm = _pick_tile(M, (512, 256, 128, 64, 32, 16, 8))
    tn = _pick_tile(N, (512, 256, 128))
    tk = _pick_tile(K, (512, 256, 128))
    return pl.pallas_call(
        _matmul_bias_kernel,
        out_shape=jax.ShapeDtypeStruct((M, N), jnp.float32),
        grid_spec=pltpu.PrefetchScalarGridSpec(
            num_scalar_prefetch=0,
            grid=(M // tm, N // tn, K // tk),
            in_specs=[pl.BlockSpec((tm, tk), lambda i, j, k: (i, k)),
                      pl.BlockSpec((tk, tn), lambda i, j, k: (k, j)),
                      pl.BlockSpec((1, tn), lambda i, j, k: (0, j))],
            out_specs=pl.BlockSpec((tm, tn), lambda i, j, k: (i, j)),
        ),
        compiler_params=pltpu.CompilerParams(
            dimension_semantics=("parallel", "parallel", "arbitrary"),
            vmem_limit_bytes=48 * 1024 * 1024),
    )(a, b, bias)


# ------------------------ recurrent (sequential) kernel ------------------------
def _lstm_chunk_kernel(xg_ref, wh_hbm, h_out_ref, h_scr, c_scr, wh_scr, dma_sem):
    """One grid step == Tc LSTM timesteps.

    xg_ref   : (Tc, Bp, 4*Hp)  precomputed x @ Wx gate preactivations [f|i|c|o]
    wh_hbm   : (Hp, 4*Hp)      fused recurrent weights, left in HBM (pl.ANY)
    h_out_ref: (Tc, Bp, Hp)    hidden states for this chunk
    h_scr,c_scr: (Bp, Hp) f32  recurrent state carried across grid steps
    wh_scr   : (Hp, 4*Hp) f32  single-buffered VMEM copy of the invariant weight
    """
    @pl.when(pl.program_id(0) == 0)
    def _():
        # invariant weight: one manual DMA into VMEM, resident for the whole grid
        cp = pltpu.make_async_copy(wh_hbm, wh_scr, dma_sem)
        cp.start()
        cp.wait()
        h_scr[...] = jnp.zeros_like(h_scr)
        c_scr[...] = jnp.zeros_like(c_scr)

    Hp = h_scr.shape[1]
    Tc = xg_ref.shape[0]
    wh = wh_scr[...]                          # hoisted, time-invariant

    def sig(x):
        # logistic via a single tanh -> exactly one EUP push per gate
        return 0.5 * jnp.tanh(0.5 * x) + 0.5

    def step(s, carry):
        h_prev, c_prev = carry
        # only the small recurrent matmul stays on the serial critical path
        pre = xg_ref[s] + jnp.dot(h_prev, wh, preferred_element_type=jnp.float32)
        f_t = sig(pre[:, 0 * Hp:1 * Hp])
        i_t = sig(pre[:, 1 * Hp:2 * Hp])
        g_t = jnp.tanh(pre[:, 2 * Hp:3 * Hp])
        o_t = sig(pre[:, 3 * Hp:4 * Hp])
        c_t = f_t * c_prev + i_t * g_t
        h_t = o_t * jnp.tanh(c_t)
        h_out_ref[s] = h_t
        return (h_t, c_t)

    h_f, c_f = jax.lax.fori_loop(0, Tc, step, (h_scr[...], c_scr[...]),
                                 unroll=True)
    h_scr[...] = h_f
    c_scr[...] = c_f


def _lstm_recurrence(xg, wh4, Tc):
    """xg: (Sp, Bp, 4*Hp), wh4: (Hp, 4*Hp) -> h_seq (Sp, Bp, Hp), time-major."""
    Sp, Bp, H4 = xg.shape
    Hp = H4 // 4
    return pl.pallas_call(
        _lstm_chunk_kernel,
        out_shape=jax.ShapeDtypeStruct((Sp, Bp, Hp), jnp.float32),
        grid_spec=pltpu.PrefetchScalarGridSpec(
            num_scalar_prefetch=0,
            grid=(Sp // Tc,),
            in_specs=[
                pl.BlockSpec((Tc, Bp, H4), lambda t: (t, 0, 0)),
                pl.BlockSpec(memory_space=pl.ANY),     # weight stays in HBM
            ],
            out_specs=pl.BlockSpec((Tc, Bp, Hp), lambda t: (t, 0, 0)),
            scratch_shapes=[pltpu.VMEM((Bp, Hp), jnp.float32),
                            pltpu.VMEM((Bp, Hp), jnp.float32),
                            pltpu.VMEM((Hp, H4), jnp.float32),
                            pltpu.SemaphoreType.DMA(())],
        ),
        compiler_params=pltpu.CompilerParams(
            dimension_semantics=("arbitrary",),        # recurrence: serial axis
            vmem_limit_bytes=48 * 1024 * 1024),
    )(xg, wh4)


# ------------------------------- glue ----------------------------------------
def _pack_padded_tm(logits_tm, lengths, V):
    """pack_padded_sequence(batch_first=True).data from a TIME-MAJOR tensor.

    logits_tm: (Sp, Bp, Vp); lengths sorted descending (enforce_sorted=True).
    Returns (sum(lengths), V).
    """
    # TODO(synk): ragged packing has Python-level dynamic shapes; kept host-side.
    pieces = []
    for t in range(max(lengths)):
        bs = sum(1 for L in lengths if L > t)
        pieces.append(logits_tm[t, :bs, :V])
    return jnp.concatenate(pieces, axis=0)


def prepare_params(params, embed_size, hidden_size):
    """One-time weight fusion + padding: [f|i|c|o] packed, lane-aligned."""
    embed_tbl, wf, wi, wc, wo, wlin, blin = params
    E, H = embed_size, hidden_size
    Hp = _round_up(H, 128)
    V = wlin.shape[1]
    Vp = _round_up(V, 128)

    # PyTorch applies each W to cat([x, h], 1): split into x-part / h-part, pad
    # each gate's H columns to Hp with zeros (padded h/c lanes then stay exactly 0).
    def split_pad(w):
        wx = jnp.pad(w[:E], ((0, 0), (0, Hp - H)))          # (E, Hp)
        wh = jnp.pad(w[E:], ((0, Hp - H), (0, Hp - H)))      # (Hp, Hp)
        return wx, wh

    wx_parts, wh_parts = zip(*(split_pad(w) for w in (wf, wi, wc, wo)))
    wx4 = jnp.concatenate(wx_parts, axis=1)                  # (E, 4*Hp)
    wh4 = jnp.concatenate(wh_parts, axis=1)                  # (Hp, 4*Hp)
    wlin_p = jnp.pad(wlin, ((0, Hp - H), (0, Vp - V)))       # (Hp, Vp)
    blin_p = jnp.pad(blin, ((0, 0), (0, Vp - V)))            # (1, Vp)
    return (embed_tbl, wx4, wh4, wlin_p, blin_p, V)


def decoder_forward(features, captions, lengths, prepped):
    """Decoder.forward: features (B, E) f32, captions (B, T) int32, lengths list."""
    embed_tbl, wx4, wh4, wlin_p, blin_p, V = prepped
    B, E = features.shape
    Hp, H4 = wh4.shape

    # glue: embedding gather built directly TIME-MAJOR (no big (B,S,E) transpose)
    embedded_tm = embed_tbl[captions.T]                      # (T, B, E)
    x_tm = jnp.concatenate([features[None], embedded_tm], axis=0)   # (S, B, E)
    S = x_tm.shape[0]

    Bp = max(8, _round_up(B, 8))
    Tc = 16                                                  # timesteps per grid step
    Sp = _round_up(S, Tc)

    # pad the SMALL input once; xg is then produced directly in padded layout
    x_pad = jnp.pad(x_tm, ((0, Sp - S), (0, Bp - B), (0, 0)))   # (Sp, Bp, E)

    # hoisted input projection: one big matmul over all timesteps (no gate bias
    # in the module -> zero bias in the epilogue)
    zero_bias = jnp.zeros((1, H4), jnp.float32)
    xg = pallas_matmul_bias(x_pad.reshape(Sp * Bp, E), wx4, zero_bias)
    xg = xg.reshape(Sp, Bp, H4)

    # sequential recurrence (the only serial Pallas kernel)
    h_seq = _lstm_recurrence(xg, wh4, Tc)                    # (Sp, Bp, Hp)

    # hoisted output Linear with FUSED bias; logits stay time-major and padded
    logits = pallas_matmul_bias(h_seq.reshape(Sp * Bp, Hp), wlin_p, blin_p)
    logits_tm = logits.reshape(Sp, Bp, -1)                   # (Sp, Bp, Vp)

    return _pack_padded_tm(logits_tm, lengths, V)


# ------------------------- pure-JAX reference ---------------------------------
def decoder_forward_ref(features, captions, lengths, params):
    embed_tbl, wf, wi, wc, wo, wlin, blin = params
    B = features.shape[0]
    H = wf.shape[1]
    embedded = embed_tbl[captions]
    seq = jnp.concatenate([features[:, None, :], embedded], axis=1)  # (B, S, E)
    h = jnp.zeros((B, H), jnp.float32)
    c = jnp.zeros((B, H), jnp.float32)
    outs = []
    for s in range(seq.shape[1]):
        hx = jnp.concatenate([seq[:, s, :], h], axis=1)
        f = jax.nn.sigmoid(hx @ wf)
        i = jax.nn.sigmoid(hx @ wi)
        g = jnp.tanh(hx @ wc)
        o = jax.nn.sigmoid(hx @ wo)
        c = f * c + i * g
        h = o * jnp.tanh(c)
        outs.append(h)
    hs = jnp.stack(outs, axis=1)                 # (B, S, H)
    logits = hs @ wlin + blin                    # (B, S, V)
    pieces = []
    for t in range(max(lengths)):
        bs = sum(1 for L in lengths if L > t)
        pieces.append(logits[:bs, t, :])
    return jnp.concatenate(pieces, axis=0)


# ------------------------------- main -----------------------------------------
def init_params(key, vocab_size, embed_size, hidden_size):
    ks = jax.random.split(key, 7)
    s = 0.1
    EH = embed_size + hidden_size
    embed_tbl = jax.random.normal(ks[0], (vocab_size, embed_size), jnp.float32) * s
    wf = jax.random.normal(ks[1], (EH, hidden_size), jnp.float32) * s   # Wxf (cat(x,h) -> h)
    wi = jax.random.normal(ks[2], (EH, hidden_size), jnp.float32) * s   # Wxi
    wc = jax.random.normal(ks[3], (EH, hidden_size), jnp.float32) * s   # Wxc
    wo = jax.random.normal(ks[4], (EH, hidden_size), jnp.float32) * s   # Wxo
    wlin = jax.random.normal(ks[5], (hidden_size, vocab_size), jnp.float32) * s
    blin = jax.random.normal(ks[6], (1, vocab_size), jnp.float32) * s
    return (embed_tbl, wf, wi, wc, wo, wlin, blin)


if __name__ == "__main__":
    # small shapes consistent with the module (original hardcodes embed+hidden=768, hidden=512)
    B, E, H, V, T = 2, 32, 64, 100, 8
    lengths = [9, 7]  # <= T+1, sorted descending (pack_padded_sequence enforce_sorted)

    key = jax.random.PRNGKey(0)
    kp, kf, kc = jax.random.split(key, 3)
    params = init_params(kp, V, E, H)
    features = jax.random.normal(kf, (B, E), jnp.float32)
    captions = jax.random.randint(kc, (B, T), 0, V, jnp.int32)

    prepped = prepare_params(params, E, H)       # one-time weight fusion + padding
    out = decoder_forward(features, captions, lengths, prepped)
    out = jax.block_until_ready(out)

    ref = decoder_forward_ref(features, captions, lengths, params)
    assert out.shape == (sum(lengths), V), out.shape
    assert jnp.allclose(out, ref, atol=1e-3, rtol=1e-3), float(jnp.max(jnp.abs(out - ref)))

    print("KERNEL_OK")
</pallas_src>

<mosaic_0001>
module attributes {stable_mosaic.version = 11 : i64} {
  func.func @_matmul_bias_kernel(%arg0: i32, %arg1: i32, %arg2: i32, %arg3: memref<128x32xf32, #tpu.memory_space<vmem>>, %arg4: memref<32x512xf32, #tpu.memory_space<vmem>>, %arg5: memref<1x512xf32, #tpu.memory_space<vmem>>, %arg6: memref<128x512xf32, #tpu.memory_space<vmem>>) attributes {dimension_semantics = [#tpu.dimension_semantics<parallel>, #tpu.dimension_semantics<parallel>, #tpu.dimension_semantics<arbitrary>], iteration_bounds = array<i64: 1, 1, 1>, scalar_prefetch = 0 : i64, scratch_operands = 0 : i64, tpu.core_type = #tpu.core_type<tc>, window_params = [{transform_indices = @transform_0, window_bounds = array<i64: 128, 32>}, {transform_indices = @transform_1, window_bounds = array<i64: 32, 512>}, {transform_indices = @transform_2, window_bounds = array<i64: 1, 512>}, {transform_indices = @transform_3, window_bounds = array<i64: 128, 512>}]} {
    %c0_i32 = arith.constant 0 : i32
    %0 = arith.cmpi eq, %arg2, %c0_i32 : i32
    %1 = arith.extui %0 : i1 to i32
    %c0_i32_0 = arith.constant 0 : i32
    %2 = arith.cmpi ne, %1, %c0_i32_0 : i32
    scf.if %2 {
      %cst_10 = arith.constant 0.000000e+00 : f32
      %12 = vector.broadcast %cst_10 : f32 to vector<128x512xf32>
      %c0_11 = arith.constant 0 : index
      %c0_12 = arith.constant 0 : index
      %13 = vector.load %arg6[%c0_11, %c0_12] : memref<128x512xf32, #tpu.memory_space<vmem>>, vector<128x512xf32>
      tpu.vector_store %arg6[%c0_11, %c0_12], %12 {strides = array<i32>} : memref<128x512xf32, #tpu.memory_space<vmem>>, vector<128x512xf32>,
    } else {
    }
    %c0 = arith.constant 0 : index
    %c0_1 = arith.constant 0 : index
    %3 = vector.load %arg6[%c0, %c0_1] : memref<128x512xf32, #tpu.memory_space<vmem>>, vector<128x512xf32>
    %c0_2 = arith.constant 0 : index
    %c0_3 = arith.constant 0 : index
    %4 = vector.load %arg3[%c0_2, %c0_3] : memref<128x32xf32, #tpu.memory_space<vmem>>, vector<128x32xf32>
    %c0_4 = arith.constant 0 : index
    %c0_5 = arith.constant 0 : index
    %5 = vector.load %arg4[%c0_4, %c0_5] : memref<32x512xf32, #tpu.memory_space<vmem>>, vector<32x512xf32>
    %cst = arith.constant dense<0.000000e+00> : vector<128x512xf32>
    %6 = tpu.matmul %4, %5, %cst {dimension_numbers = #tpu.dot_dimension_numbers<[1], [0], [0], [1], [0, 0, 1, 1], [], []>} : vector<128x32xf32>, vector<32x512xf32>, vector<128x512xf32> -> vector<128x512xf32>
    %7 = arith.addf %3, %6 : vector<128x512xf32>
    %c0_6 = arith.constant 0 : index
    %c0_7 = arith.constant 0 : index
    %8 = vector.load %arg6[%c0_6, %c0_7] : memref<128x512xf32, #tpu.memory_space<vmem>>, vector<128x512xf32>
    tpu.vector_store %arg6[%c0_6, %c0_7], %7 {strides = array<i32>} : memref<128x512xf32, #tpu.memory_space<vmem>>, vector<128x512xf32>,
    %c0_i32_8 = arith.constant 0 : i32
    %9 = arith.cmpi eq, %arg2, %c0_i32_8 : i32
    %10 = arith.extui %9 : i1 to i32
    %c0_i32_9 = arith.constant 0 : i32
    %11 = arith.cmpi ne, %10, %c0_i32_9 : i32
    scf.if %11 {
      %c0_10 = arith.constant 0 : index
      %c0_11 = arith.constant 0 : index
      %12 = vector.load %arg6[%c0_10, %c0_11] : memref<128x512xf32, #tpu.memory_space<vmem>>, vector<128x512xf32>
      %c0_12 = arith.constant 0 : index
      %c0_13 = arith.constant 0 : index
      %13 = vector.load %arg5[%c0_12, %c0_13] : memref<1x512xf32, #tpu.memory_space<vmem>>, vector<1x512xf32>
      %14 = vector.broadcast %13 : vector<1x512xf32> to vector<128x512xf32>
      %15 = arith.addf %12, %14 : vector<128x512xf32>
      %c0_14 = arith.constant 0 : index
      %c0_15 = arith.constant 0 : index
      %16 = vector.load %arg6[%c0_14, %c0_15] : memref<128x512xf32, #tpu.memory_space<vmem>>, vector<128x512xf32>
      tpu.vector_store %arg6[%c0_14, %c0_15], %15 {strides = array<i32>} : memref<128x512xf32, #tpu.memory_space<vmem>>, vector<128x512xf32>,
    } else {
    }
    return
  }
  func.func @transform_0(%arg0: i32, %arg1: i32, %arg2: i32) -> (i32, i32) {
    %c0_i32 = arith.constant 0 : i32
    return %arg0, %arg2 : i32, i32
  }
  func.func @transform_1(%arg0: i32, %arg1: i32, %arg2: i32) -> (i32, i32) {
    %c0_i32 = arith.constant 0 : i32
    return %arg2, %arg1 : i32, i32
  }
  func.func @transform_2(%arg0: i32, %arg1: i32, %arg2: i32) -> (i32, i32) {
    %c0_i32 = arith.constant 0 : i32
    %c0_i32_0 = arith.constant 0 : i32
    return %c0_i32, %arg1 : i32, i32
  }
  func.func @transform_3(%arg0: i32, %arg1: i32, %arg2: i32) -> (i32, i32) {
    %c0_i32 = arith.constant 0 : i32
    return %arg0, %arg1 : i32, i32
  }
}

</mosaic_0001>

<llo_original>
// kernel: tpu_custom_call.1
$region0: #{tpu_custom_call.1}
  #allocation0 [shape = 'u32[]', space=smem, size = 0x4, offset = 0x4, fixed_abs, tag = 'smem constant byte address 0x4 - core index']
  #allocation1 [shape = 'u32[144,128]{1,0:T(1,128)}', space=vmem, size = 0x12000, scoped, tag = 'internal scratch']
  %s0 = inlined_call_operand.vmem [shape: f32[128,32], index: 0, kind: input, shape index: {}]
  %s1 = inlined_call_operand.vmem [shape: f32[32,512], index: 1, kind: input, shape index: {}]
  %s2 = inlined_call_operand.vmem [shape: f32[1,512], index: 2, kind: input, shape index: {}]
  %s3 = inlined_call_operand.hbm [shape: f32[128,512], index: 3, kind: output, shape index: {}]
  %s4 = sld [smem:[#allocation0]]
  $region30: #{tpu_custom_call.1} parent=0
    _
  %s6 = ssub.s32 1, %s4
  %s7 = scalar_select 0, %s6, %s4
  $region1: #{tpu_custom_call.1} parent=0
    #allocation2 [shape = 'u8[262144]{0}', space=vmem, size = 0x40000, scoped, tag = 'output window, operand 0, single buffered']
    #allocation3 [shape = 's32[1]{0}', space=sflag, size = 0x4, scoped, tag = 'scoped memory for tpu_custom_call.1']
    %8 = vsyncpa [#allocation3], 0
    // Predicated region
    $region2: #{tpu_custom_call.1} parent=1 // pred_check
      _
    $region3: #{tpu_custom_call.1} parent=1 // pred_check_branch
      %10 = sbr.rel (0) target = $region5
    $region4: #{tpu_custom_call.1} parent=1 // pred_region
      _
    $region5: #{tpu_custom_call.1} parent=1 // pred_fallthru
      _
    // Predicated region
    $region6: #{tpu_custom_call.1} parent=1 // pred_check
      _
    $region7: #{tpu_custom_call.1} parent=1 // pred_check_branch
      %12 = sbr.rel (0) target = $region9
    $region8: #{tpu_custom_call.1} parent=1 // pred_region
      _
    $region9: #{tpu_custom_call.1} parent=1 // pred_fallthru
      _
    // Predicated region
    $region10: #{tpu_custom_call.1} parent=1 // pred_check
      _
    $region11: #{tpu_custom_call.1} parent=1 // pred_check_branch
      %14 = sbr.rel (0) target = $region13
    $region12: #{tpu_custom_call.1} parent=1 // pred_region
      _
    $region13: #{tpu_custom_call.1} parent=1 // pred_fallthru
      _
    %p15 = scmp.eq.s32.totalorder 0, 0
    // Predicated region
    $region14: #{tpu_custom_call.1} parent=1 // pred_check
      %p16 = pneg %p15
    $region15: #{tpu_custom_call.1} parent=1 // pred_check_branch
      %18 = sbr.rel (%p16) target = $region17
    $region16: #{tpu_custom_call.1} parent=1 // pred_region
      %19 = vst [vmem:[#allocation2] sm:$0xff] 0.0
      %20 = vst [vmem:[#allocation2 + $0x8] sm:$0xff] 0.0
      %21 = vst [vmem:[#allocation2 + $0x10] sm:$0xff] 0.0
      %22 = vst [vmem:[#allocation2 + $0x18] sm:$0xff] 0.0
      %23 = vst [vmem:[#allocation2 + $0x20] sm:$0xff] 0.0
      %24 = vst [vmem:[#allocation2 + $0x28] sm:$0xff] 0.0
      %25 = vst [vmem:[#allocation2 + $0x30] sm:$0xff] 0.0
      %26 = vst [vmem:[#allocation2 + $0x38] sm:$0xff] 0.0
      %27 = vst [vmem:[#allocation2 + $0x40] sm:$0xff] 0.0
      %28 = vst [vmem:[#allocation2 + $0x48] sm:$0xff] 0.0
      %29 = vst [vmem:[#allocation2 + $0x50] sm:$0xff] 0.0
      %30 = vst [vmem:[#allocation2 + $0x58] sm:$0xff] 0.0
      %31 = vst [vmem:[#allocation2 + $0x60] sm:$0xff] 0.0
      %32 = vst [vmem:[#allocation2 + $0x68] sm:$0xff] 0.0
      %33 = vst [vmem:[#allocation2 + $0x70] sm:$0xff] 0.0
      %34 = vst [vmem:[#allocation2 + $0x78] sm:$0xff] 0.0
      %35 = vst [vmem:[#allocation2 + $0x80] sm:$0xff] 0.0
      %36 = vst [vmem:[#allocation2 + $0x88] sm:$0xff] 0.0
      %37 = vst [vmem:[#allocation2 + $0x90] sm:$0xff] 0.0
      %38 = vst [vmem:[#allocation2 + $0x98] sm:$0xff] 0.0
      %39 = vst [vmem:[#allocation2 + $0xa0] sm:$0xff] 0.0
      %40 = vst [vmem:[#allocation2 + $0xa8] sm:$0xff] 0.0
      %41 = vst [vmem:[#allocation2 + $0xb0] sm:$0xff] 0.0
      %42 = vst [vmem:[#allocation2 + $0xb8] sm:$0xff] 0.0
      %43 = vst [vmem:[#allocation2 + $0xc0] sm:$0xff] 0.0
      %44 = vst [vmem:[#allocation2 + $0xc8] sm:$0xff] 0.0
      %45 = vst [vmem:[#allocation2 + $0xd0] sm:$0xff] 0.0
      %46 = vst [vmem:[#allocation2 + $0xd8] sm:$0xff] 0.0
      %47 = vst [vmem:[#allocation2 + $0xe0] sm:$0xff] 0.0
      %48 = vst [vmem:[#allocation2 + $0xe8] sm:$0xff] 0.0
      %49 = vst [vmem:[#allocation2 + $0xf0] sm:$0xff] 0.0
      %50 = vst [vmem:[#allocation2 + $0xf8] sm:$0xff] 0.0
      %51 = vst [vmem:[#allocation2 + $0x100] sm:$0xff] 0.0
      %52 = vst [vmem:[#allocation2 + $0x108] sm:$0xff] 0.0
      %53 = vst [vmem:[#allocation2 + $0x110] sm:$0xff] 0.0
      %54 = vst [vmem:[#allocation2 + $0x118] sm:$0xff] 0.0
      %55 = vst [vmem:[#allocation2 + $0x120] sm:$0xff] 0.0
      %56 = vst [vmem:[#allocation2 + $0x128] sm:$0xff] 0.0
      %57 = vst [vmem:[#allocation2 + $0x130] sm:$0xff] 0.0
      %58 = vst [vmem:[#allocation2 + $0x138] sm:$0xff] 0.0
      %59 = vst [vmem:[#allocation2 + $0x140] sm:$0xff] 0.0
      %60 = vst [vmem:[#allocation2 + $0x148] sm:$0xff] 0.0
      %61 = vst [vmem:[#allocation2 + $0x150] sm:$0xff] 0.0
      %62 = vst [vmem:[#allocation2 + $0x158] sm:$0xff] 0.0
      %63 = vst [vmem:[#allocation2 + $0x160] sm:$0xff] 0.0
      %64 = vst [vmem:[#allocation2 + $0x168] sm:$0xff] 0.0
      %65 = vst [vmem:[#allocation2 + $0x170] sm:$0xff] 0.0
      %66 = vst [vmem:[#allocation2 + $0x178] sm:$0xff] 0.0
      %67 = vst [vmem:[#allocation2 + $0x180] sm:$0xff] 0.0
      %68 = vst [vmem:[#allocation2 + $0x188] sm:$0xff] 0.0
      %69 = vst [vmem:[#allocation2 + $0x190] sm:$0xff] 0.0
      %70 = vst [vmem:[#allocation2 + $0x198] sm:$0xff] 0.0
      %71 = vst [vmem:[#allocation2 + $0x1a0] sm:$0xff] 0.0
      %72 = vst [vmem:[#allocation2 + $0x1a8] sm:$0xff] 0.0
      %73 = vst [vmem:[#allocation2 + $0x1b0] sm:$0xff] 0.0
      %74 = vst [vmem:[#allocation2 + $0x1b8] sm:$0xff] 0.0
      %75 = vst [vmem:[#allocation2 + $0x1c0] sm:$0xff] 0.0
      %76 = vst [vmem:[#allocation2 + $0x1c8] sm:$0xff] 0.0
      %77 = vst [vmem:[#allocation2 + $0x1d0] sm:$0xff] 0.0
      %78 = vst [vmem:[#allocation2 + $0x1d8] sm:$0xff] 0.0
      %79 = vst [vmem:[#allocation2 + $0x1e0] sm:$0xff] 0.0
      %80 = vst [vmem:[#allocation2 + $0x1e8] sm:$0xff] 0.0
      %81 = vst [vmem:[#allocation2 + $0x1f0] sm:$0xff] 0.0
      %82 = vst [vmem:[#allocation2 + $0x1f8] sm:$0xff] 0.0
    $region17: #{tpu_custom_call.1} parent=1 // pred_fallthru
      _
    %v83 = vld [vmem:[#allocation2] sm:$0xff]
    %v84 = vld [vmem:[#allocation2 + $0x8] sm:$0xff]
    %v85 = vld [vmem:[#allocation2 + $0x10] sm:$0xff]
    %v86 = vld [vmem:[#allocation2 + $0x18] sm:$0xff]
    %v87 = vld [vmem:[#allocation2 + $0x20] sm:$0xff]
    %v88 = vld [vmem:[#allocation2 + $0x28] sm:$0xff]
    %v89 = vld [vmem:[#allocation2 + $0x30] sm:$0xff]
    %v90 = vld [vmem:[#allocation2 + $0x38] sm:$0xff]
    %v91 = vld [vmem:[#allocation2 + $0x40] sm:$0xff]
    %v92 = vld [vmem:[#allocation2 + $0x48] sm:$0xff]
    %v93 = vld [vmem:[#allocation2 + $0x50] sm:$0xff]
    %v94 = vld [vmem:[#allocation2 + $0x58] sm:$0xff]
    %v95 = vld [vmem:[#allocation2 + $0x60] sm:$0xff]
    %v96 = vld [vmem:[#allocation2 + $0x68] sm:$0xff]
    %v97 = vld [vmem:[#allocation2 + $0x70] sm:$0xff]
    %v98 = vld [vmem:[#allocation2 + $0x78] sm:$0xff]
    %v99 = vld [vmem:[#allocation2 + $0x80] sm:$0xff]
    %v100 = vld [vmem:[#allocation2 + $0x88] sm:$0xff]
    %v101 = vld [vmem:[#allocation2 + $0x90] sm:$0xff]
    %v102 = vld [vmem:[#allocation2 + $0x98] sm:$0xff]
    %v103 = vld [vmem:[#allocation2 + $0xa0] sm:$0xff]
    %v104 = vld [vmem:[#allocation2 + $0xa8] sm:$0xff]
    %v105 = vld [vmem:[#allocation2 + $0xb0] sm:$0xff]
    %v106 = vld [vmem:[#allocation2 + $0xb8] sm:$0xff]
    %v107 = vld [vmem:[#allocation2 + $0xc0] sm:$0xff]
    %v108 = vld [vmem:[#allocation2 + $0xc8] sm:$0xff]
    %v109 = vld [vmem:[#allocation2 + $0xd0] sm:$0xff]
    %v110 = vld [vmem:[#allocation2 + $0xd8] sm:$0xff]
    %v111 = vld [vmem:[#allocation2 + $0xe0] sm:$0xff]
    %v112 = vld [vmem:[#allocation2 + $0xe8] sm:$0xff]
    %v113 = vld [vmem:[#allocation2 + $0xf0] sm:$0xff]
    %v114 = vld [vmem:[#allocation2 + $0xf8] sm:$0xff]
    %v115 = vld [vmem:[#allocation2 + $0x100] sm:$0xff]
    %v116 = vld [vmem:[#allocation2 + $0x108] sm:$0xff]
    %v117 = vld [vmem:[#allocation2 + $0x110] sm:$0xff]
    %v118 = vld [vmem:[#allocation2 + $0x118] sm:$0xff]
    %v119 = vld [vmem:[#allocation2 + $0x120] sm:$0xff]
    %v120 = vld [vmem:[#allocation2 + $0x128] sm:$0xff]
    %v121 = vld [vmem:[#allocation2 + $0x130] sm:$0xff]
    %v122 = vld [vmem:[#allocation2 + $0x138] sm:$0xff]
    %v123 = vld [vmem:[#allocation2 + $0x140] sm:$0xff]
    %v124 = vld [vmem:[#allocation2 + $0x148] sm:$0xff]
    %v125 = vld [vmem:[#allocation2 + $0x150] sm:$0xff]
    %v126 = vld [vmem:[#allocation2 + $0x158] sm:$0xff]
    %v127 = vld [vmem:[#allocation2 + $0x160] sm:$0xff]
    %v128 = vld [vmem:[#allocation2 + $0x168] sm:$0xff]
    %v129 = vld [vmem:[#allocation2 + $0x170] sm:$0xff]
    %v130 = vld [vmem:[#allocation2 + $0x178] sm:$0xff]
    %v131 = vld [vmem:[#allocation2 + $0x180] sm:$0xff]
    %v132 = vld [vmem:[#allocation2 + $0x188] sm:$0xff]
    %v133 = vld [vmem:[#allocation2 + $0x190] sm:$0xff]
    %v134 = vld [vmem:[#allocation2 + $0x198] sm:$0xff]
    %v135 = vld [vmem:[#allocation2 + $0x1a0] sm:$0xff]
    %v136 = vld [vmem:[#allocation2 + $0x1a8] sm:$0xff]
    %v137 = vld [vmem:[#allocation2 + $0x1b0] sm:$0xff]
    %v138 = vld [vmem:[#allocation2 + $0x1b8] sm:$0xff]
    %v139 = vld [vmem:[#allocation2 + $0x1c0] sm:$0xff]
    %v140 = vld [vmem:[#allocation2 + $0x1c8] sm:$0xff]
    %v141 = vld [vmem:[#allocation2 + $0x1d0] sm:$0xff]
    %v142 = vld [vmem:[#allocation2 + $0x1d8] sm:$0xff]
    %v143 = vld [vmem:[#allocation2 + $0x1e0] sm:$0xff]
    %v144 = vld [vmem:[#allocation2 + $0x1e8] sm:$0xff]
    %v145 = vld [vmem:[#allocation2 + $0x1f0] sm:$0xff]
    %v146 = vld [vmem:[#allocation2 + $0x1f8] sm:$0xff]
    %v147 = vld [vmem:[%s0] sm:$0xff]
    %v148 = vld [vmem:[%s0 + $0x8] sm:$0xff]
    %v149 = vld [vmem:[%s0 + $0x10] sm:$0xff]
    %v150 = vld [vmem:[%s0 + $0x18] sm:$0xff]
    %v151 = vld [vmem:[%s0 + $0x20] sm:$0xff]
    %v152 = vld [vmem:[%s0 + $0x28] sm:$0xff]
    %v153 = vld [vmem:[%s0 + $0x30] sm:$0xff]
    %v154 = vld [vmem:[%s0 + $0x38] sm:$0xff]
    %v155 = vld [vmem:[%s0 + $0x40] sm:$0xff]
    %v156 = vld [vmem:[%s0 + $0x48] sm:$0xff]
    %v157 = vld [vmem:[%s0 + $0x50] sm:$0xff]
    %v158 = vld [vmem:[%s0 + $0x58] sm:$0xff]
    %v159 = vld [vmem:[%s0 + $0x60] sm:$0xff]
    %v160 = vld [vmem:[%s0 + $0x68] sm:$0xff]
    %v161 = vld [vmem:[%s0 + $0x70] sm:$0xff]
    %v162 = vld [vmem:[%s0 + $0x78] sm:$0xff]
    %v163 = vld [vmem:[%s1] sm:$0xff]
    %v164 = vld [vmem:[%s1 + $0x8] sm:$0xff]
    %v165 = vld [vmem:[%s1 + $0x10] sm:$0xff]
    %v166 = vld [vmem:[%s1 + $0x18] sm:$0xff]
    %v167 = vld [vmem:[%s1 + $0x20] sm:$0xff]
    %v168 = vld [vmem:[%s1 + $0x28] sm:$0xff]
    %v169 = vld [vmem:[%s1 + $0x30] sm:$0xff]
    %v170 = vld [vmem:[%s1 + $0x38] sm:$0xff]
    %v171 = vld [vmem:[%s1 + $0x40] sm:$0xff]
    %v172 = vld [vmem:[%s1 + $0x48] sm:$0xff]
    %v173 = vld [vmem:[%s1 + $0x50] sm:$0xff]
    %v174 = vld [vmem:[%s1 + $0x58] sm:$0xff]
    %v175 = vld [vmem:[%s1 + $0x60] sm:$0xff]
    %v176 = vld [vmem:[%s1 + $0x68] sm:$0xff]
    %v177 = vld [vmem:[%s1 + $0x70] sm:$0xff]
    %v178 = vld [vmem:[%s1 + $0x78] sm:$0xff]
    %vm179 = vcmask 261120
    %v181 = vsel %vm179, %v147, 0
    %v184 = vsel %vm179, %v148, 0
    %v187 = vsel %vm179, %v149, 0
    %v190 = vsel %vm179, %v150, 0
    %v193 = vsel %vm179, %v151, 0
    %v196 = vsel %vm179, %v152, 0
    %v199 = vsel %vm179, %v153, 0
    %v202 = vsel %vm179, %v154, 0
    %v205 = vsel %vm179, %v155, 0
    %v208 = vsel %vm179, %v156, 0
    %v211 = vsel %vm179, %v157, 0
    %v214 = vsel %vm179, %v158, 0
    %v217 = vsel %vm179, %v159, 0
    %v220 = vsel %vm179, %v160, 0
    %v223 = vsel %vm179, %v161, 0
    %v226 = vsel %vm179, %v162, 0
    %228 = vmatprep.subr.mxu0 %v164
    %229 = vmatpush1.msra.mxu0 %v163
    %230 = vmatprep.subr.mxu0 %v168
    %231 = vmatpush1.msra.mxu0 %v167
    %232 = vmatprep.subr.mxu0 %v172
    %233 = vmatpush1.msra.mxu0 %v171
    %234 = vmatprep.subr.mxu0 %v176
    %235 = vmatpush1.msra.mxu0 %v175
    %236 = vmatprep.subr.mxu0 0.0
    %237 = vmatpush1.msra.mxu0 0.0
    %238 = vmatprep.subr.mxu0 0.0
    %239 = vmatpush1.msra.mxu0 0.0
    %240 = vmatprep.subr.mxu0 0.0
    %241 = vmatpush1.msra.mxu0 0.0
    %242 = vmatprep.subr.mxu0 0.0
    %243 = vmatpush1.msra.mxu0 0.0
    %244 = vmatprep.subr.mxu0 0.0
    %245 = vmatpush1.msra.mxu0 0.0
    %246 = vmatprep.subr.mxu0 0.0
    %247 = vmatpush1.msra.mxu0 0.0
    %248 = vmatprep.subr.mxu0 0.0
    %249 = vmatpush1.msra.mxu0 0.0
    %250 = vmatprep.subr.mxu0 0.0
    %251 = vmatpush1.msra.mxu0 0.0
    %252 = vmatprep.subr.mxu0 0.0
    %253 = vmatpush1.msra.mxu0 0.0
    %254 = vmatprep.subr.mxu0 0.0
    %255 = vmatpush1.msra.mxu0 0.0
    %256 = vmatprep.subr.mxu0 0.0
    %257 = vmatpush1.msra.mxu0 0.0
    %258 = vmatprep.subr.mxu0 0.0
    %259 = vmatpush1.msra.mxu0 0.0
    %260 = vmatprep.subr.mxu0 0.0
    %261 = vmatpush1.msra.mxu0 0.0
    %262 = vmatprep.subr.mxu0 0.0
    %263 = vmatpush1.msra.mxu0 0.0
    %264 = vmatprep.subr.mxu0 0.0
    %265 = vmatpush1.msra.mxu0 0.0
    %266 = vmatprep.subr.mxu0 0.0
    %267 = vmatpush1.msra.mxu0 0.0
    %268 = vmatprep.subr.mxu0 0.0
    %269 = vmatpush1.msra.mxu0 0.0
    %270 = vmatprep.subr.mxu0 0.0
    %271 = vmatpush1.msra.mxu0 0.0
    %272 = vmatprep.subr.mxu0 0.0
    %273 = vmatpush1.msra.mxu0 0.0
    %274 = vmatprep.subr.mxu0 0.0
    %275 = vmatpush1.msra.mxu0 0.0
    %276 = vmatprep.subr.mxu0 0.0
    %277 = vmatpush1.msra.mxu0 0.0
    %278 = vmatprep.subr.mxu0 0.0
    %279 = vmatpush1.msra.mxu0 0.0
    %280 = vmatprep.subr.mxu0 0.0
    %281 = vmatpush1.msra.mxu0 0.0
    %282 = vmatprep.subr.mxu0 0.0
    %283 = vmatpush1.msra.mxu0 0.0
    %284 = vmatprep.subr.mxu0 0.0
    %285 = vmatpush1.msra.mxu0 0.0
    %286 = vmatprep.subr.mxu0 0.0
    %287 = vmatpush1.msra.mxu0 0.0
    %288 = vmatprep.subr.mxu0 0.0
    %289 = vmatpush1.msra.mxu0 0.0
    %290 = vmatprep.subr.mxu0 0.0
    %291 = vmatpush1.msra.mxu0 0.0
    %292 = vmatprep.mubr.f32.mxu0 0.0
    %293 = vmatmul.mubr.f32.gmra.mrb[0].mxu0 %v181
    %v294 = vpop.f32.mrb[0].mxu0
    %v295 = vadd.f32 0.0, %v294
    %v296 = vpop.f32.mrb[0].mxu0
    %v297 = vadd.f32 0.0, %v296
    %298 = vmatprep.mubr.f32.mxu0 0.0
    %299 = vmatmul.mubr.f32.gmra.mrb[0].mxu0 %v184
    %v300 = vpop.f32.mrb[0].mxu0
    %v301 = vadd.f32 0.0, %v300
    %v302 = vpop.f32.mrb[0].mxu0
    %v303 = vadd.f32 0.0, %v302
    %304 = vmatprep.mubr.f32.mxu0 0.0
    %305 = vmatmul.mubr.f32.gmra.mrb[0].mxu0 %v187
    %v306 = vpop.f32.mrb[0].mxu0
    %v307 = vadd.f32 0.0, %v306
    %v308 = vpop.f32.mrb[0].mxu0
    %v309 = vadd.f32 0.0, %v308
    %310 = vmatprep.mubr.f32.mxu0 0.0
    %311 = vmatmul.mubr.f32.gmra.mrb[0].mxu0 %v190
    %v312 = vpop.f32.mrb[0].mxu0
    %v313 = vadd.f32 0.0, %v312
    %v314 = vpop.f32.mrb[0].mxu0
    %v315 = vadd.f32 0.0, %v314
    %316 = vmatprep.mubr.f32.mxu0 0.0
    %317 = vmatmul.mubr.f32.gmra.mrb[0].mxu0 %v193
    %v318 = vpop.f32.mrb[0].mxu0
    %v319 = vadd.f32 0.0, %v318
    %v320 = vpop.f32.mrb[0].mxu0
    %v321 = vadd.f32 0.0, %v320
    %322 = vmatprep.mubr.f32.mxu0 0.0
    %323 = vmatmul.mubr.f32.gmra.mrb[0].mxu0 %v196
    %v324 = vpop.f32.mrb[0].mxu0
    %v325 = vadd.f32 0.0, %v324
    %v326 = vpop.f32.mrb[0].mxu0
    %v327 = vadd.f32 0.0, %v326
    %328 = vmatprep.mubr.f32.mxu0 0.0
    %329 = vmatmul.mubr.f32.gmra.mrb[0].mxu0 %v199
    %v330 = vpop.f32.mrb[0].mxu0
    %v331 = vadd.f32 0.0, %v330
    %v332 = vpop.f32.mrb[0].mxu0
    %v333 = vadd.f32 0.0, %v332
    %334 = vmatprep.mubr.f32.mxu0 0.0
    %335 = vmatmul.mubr.f32.gmra.mrb[0].mxu0 %v202
    %v336 = vpop.f32.mrb[0].mxu0
    %v337 = vadd.f32 0.0, %v336
    %v338 = vpop.f32.mrb[0].mxu0
    %v339 = vadd.f32 0.0, %v338
    %340 = vmatprep.mubr.f32.mxu0 0.0
    %341 = vmatmul.mubr.f32.gmra.mrb[0].mxu0 %v205
    %v342 = vpop.f32.mrb[0].mxu0
    %v343 = vadd.f32 0.0, %v342
    %v344 = vpop.f32.mrb[0].mxu0
    %v345 = vadd.f32 0.0, %v344
    %346 = vmatprep.mubr.f32.mxu0 0.0
    %347 = vmatmul.mubr.f32.gmra.mrb[0].mxu0 %v208
    %v348 = vpop.f32.mrb[0].mxu0
    %v349 = vadd.f32 0.0, %v348
    %v350 = vpop.f32.mrb[0].mxu0
    %v351 = vadd.f32 0.0, %v350
    %352 = vmatprep.mubr.f32.mxu0 0.0
    %353 = vmatmul.mubr.f32.gmra.mrb[0].mxu0 %v211
    %v354 = vpop.f32.mrb[0].mxu0
    %v355 = vadd.f32 0.0, %v354
    %v356 = vpop.f32.mrb[0].mxu0
    %v357 = vadd.f32 0.0, %v356
    %358 = vmatprep.mubr.f32.mxu0 0.0
    %359 = vmatmul.mubr.f32.gmra.mrb[0].mxu0 %v214
    %v360 = vpop.f32.mrb[0].mxu0
    %v361 = vadd.f32 0.0, %v360
    %v362 = vpop.f32.mrb[0].mxu0
    %v363 = vadd.f32 0.0, %v362
    %364 = vmatprep.mubr.f32.mxu0 0.0
    %365 = vmatmul.mubr.f32.gmra.mrb[0].mxu0 %v217
    %v366 = vpop.f32.mrb[0].mxu0
    %v367 = vadd.f32 0.0, %v366
    %v368 = vpop.f32.mrb[0].mxu0
    %v369 = vadd.f32 0.0, %v368
    %370 = vmatprep.mubr.f32.mxu0 0.0
    %371 = vmatmul.mubr.f32.gmra.mrb[0].mxu0 %v220
    %v372 = vpop.f32.mrb[0].mxu0
    %v373 = vadd.f32 0.0, %v372
    %v374 = vpop.f32.mrb[0].mxu0
    %v375 = vadd.f32 0.0, %v374
    %376 = vmatprep.mubr.f32.mxu0 0.0
    %377 = vmatmul.mubr.f32.gmra.mrb[0].mxu0 %v223
    %v378 = vpop.f32.mrb[0].mxu0
    %v379 = vadd.f32 0.0, %v378
    %v380 = vpop.f32.mrb[0].mxu0
    %v381 = vadd.f32 0.0, %v380
    %382 = vmatprep.mubr.f32.mxu0 0.0
    %383 = vmatmul.mubr.f32.gmra.mrb[0].mxu0 %v226
    %v384 = vpop.f32.mrb[0].mxu0
    %v385 = vadd.f32 0.0, %v384
    %v386 = vpop.f32.mrb[0].mxu0
    %v387 = vadd.f32 0.0, %v386
    %388 = vdwg.mxu0
    %389 = vmatprep.subr.mxu0 %v166
    %390 = vmatpush1.msra.mxu0 %v165
    %391 = vmatprep.subr.mxu0 %v170
    %392 = vmatpush1.msra.mxu0 %v169
    %393 = vmatprep.subr.mxu0 %v174
    %394 = vmatpush1.msra.mxu0 %v173
    %395 = vmatprep.subr.mxu0 %v178
    %396 = vmatpush1.msra.mxu0 %v177
    %397 = vmatprep.subr.mxu0 0.0
    %398 = vmatpush1.msra.mxu0 0.0
    %399 = vmatprep.subr.mxu0 0.0
    %400 = vmatpush1.msra.mxu0 0.0
    %401 = vmatprep.subr.mxu0 0.0
    %402 = vmatpush1.msra.mxu0 0.0
    %403 = vmatprep.subr.mxu0 0.0
    %404 = vmatpush1.msra.mxu0 0.0
    %405 = vmatprep.subr.mxu0 0.0
    %406 = vmatpush1.msra.mxu0 0.0
    %407 = vmatprep.subr.mxu0 0.0
    %408 = vmatpush1.msra.mxu0 0.0
    %409 = vmatprep.subr.mxu0 0.0
    %410 = vmatpush1.msra.mxu0 0.0
    %411 = vmatprep.subr.mxu0 0.0
    %412 = vmatpush1.msra.mxu0 0.0
    %413 = vmatprep.subr.mxu0 0.0
    %414 = vmatpush1.msra.mxu0 0.0
    %415 = vmatprep.subr.mxu0 0.0
    %416 = vmatpush1.msra.mxu0 0.0
    %417 = vmatprep.subr.mxu0 0.0
    %418 = vmatpush1.msra.mxu0 0.0
    %419 = vmatprep.subr.mxu0 0.0
    %420 = vmatpush1.msra.mxu0 0.0
    %421 = vmatprep.subr.mxu0 0.0
    %422 = vmatpush1.msra.mxu0 0.0
    %423 = vmatprep.subr.mxu0 0.0
    %424 = vmatpush1.msra.mxu0 0.0
    %425 = vmatprep.subr.mxu0 0.0
    %426 = vmatpush1.msra.mxu0 0.0
    %427 = vmatprep.subr.mxu0 0.0
    %428 = vmatpush1.msra.mxu0 0.0
    %429 = vmatprep.subr.mxu0 0.0
    %430 = vmatpush1.msra.mxu0 0.0
    %431 = vmatprep.subr.mxu0 0.0
    %432 = vmatpush1.msra.mxu0 0.0
    %433 = vmatprep.subr.mxu0 0.0
    %434 = vmatpush1.msra.mxu0 0.0
    %435 = vmatprep.subr.mxu0 0.0
    %436 = vmatpush1.msra.mxu0 0.0
    %437 = vmatprep.subr.mxu0 0.0
    %438 = vmatpush1.msra.mxu0 0.0
    %439 = vmatprep.subr.mxu0 0.0
    %440 = vmatpush1.msra.mxu0 0.0
    %441 = vmatprep.subr.mxu0 0.0
    %442 = vmatpush1.msra.mxu0 0.0
    %443 = vmatprep.subr.mxu0 0.0
    %444 = vmatpush1.msra.mxu0 0.0
    %445 = vmatprep.subr.mxu0 0.0
    %446 = vmatpush1.msra.mxu0 0.0
    %447 = vmatprep.subr.mxu0 0.0
    %448 = vmatpush1.msra.mxu0 0.0
    %449 = vmatprep.subr.mxu0 0.0
    %450 = vmatpush1.msra.mxu0 0.0
    %451 = vmatprep.subr.mxu0 0.0
    %452 = vmatpush1.msra.mxu0 0.0
    %453 = vmatprep.mubr.f32.mxu0 0.0
    %454 = vmatmul.mubr.f32.gmra.mrb[0].mxu0 %v181
    %v455 = vpop.f32.mrb[0].mxu0
    %v456 = vadd.f32 0.0, %v455
    %v457 = vpop.f32.mrb[0].mxu0
    %v458 = vadd.f32 0.0, %v457
    %459 = vmatprep.mubr.f32.mxu0 0.0
    %460 = vmatmul.mubr.f32.gmra.mrb[0].mxu0 %v184
    %v461 = vpop.f32.mrb[0].mxu0
    %v462 = vadd.f32 0.0, %v461
    %v463 = vpop.f32.mrb[0].mxu0
    %v464 = vadd.f32 0.0, %v463
    %465 = vmatprep.mubr.f32.mxu0 0.0
    %466 = vmatmul.mubr.f32.gmra.mrb[0].mxu0 %v187
    %v467 = vpop.f32.mrb[0].mxu0
    %v468 = vadd.f32 0.0, %v467
    %v469 = vpop.f32.mrb[0].mxu0
    %v470 = vadd.f32 0.0, %v469
    %471 = vmatprep.mubr.f32.mxu0 0.0
    %472 = vmatmul.mubr.f32.gmra.mrb[0].mxu0 %v190
    %v473 = vpop.f32.mrb[0].mxu0
    %v474 = vadd.f32 0.0, %v473
    %v475 = vpop.f32.mrb[0].mxu0
    %v476 = vadd.f32 0.0, %v475
    %477 = vmatprep.mubr.f32.mxu0 0.0
    %478 = vmatmul.mubr.f32.gmra.mrb[0].mxu0 %v193
    %v479 = vpop.f32.mrb[0].mxu0
    %v480 = vadd.f32 0.0, %v479
    %v481 = vpop.f32.mrb[0].mxu0
    %v482 = vadd.f32 0.0, %v481
    %483 = vmatprep.mubr.f32.mxu0 0.0
    %484 = vmatmul.mubr.f32.gmra.mrb[0].mxu0 %v196
    %v485 = vpop.f32.mrb[0].mxu0
    %v486 = vadd.f32 0.0, %v485
    %v487 = vpop.f32.mrb[0].mxu0
    %v488 = vadd.f32 0.0, %v487
    %489 = vmatprep.mubr.f32.mxu0 0.0
    %490 = vmatmul.mubr.f32.gmra.mrb[0].mxu0 %v199
    %v491 = vpop.f32.mrb[0].mxu0
    %v492 = vadd.f32 0.0, %v491
    %v493 = vpop.f32.mrb[0].mxu0
    %v494 = vadd.f32 0.0, %v493
    %495 = vmatprep.mubr.f32.mxu0 0.0
    %496 = vmatmul.mubr.f32.gmra.mrb[0].mxu0 %v202
    %v497 = vpop.f32.mrb[0].mxu0
    %v498 = vadd.f32 0.0, %v497
    %v499 = vpop.f32.mrb[0].mxu0
    %v500 = vadd.f32 0.0, %v499
    %501 = vmatprep.mubr.f32.mxu0 0.0
    %502 = vmatmul.mubr.f32.gmra.mrb[0].mxu0 %v205
    %v503 = vpop.f32.mrb[0].mxu0
    %v504 = vadd.f32 0.0, %v503
    %v505 = vpop.f32.mrb[0].mxu0
    %v506 = vadd.f32 0.0, %v505
    %507 = vmatprep.mubr.f32.mxu0 0.0
    %508 = vmatmul.mubr.f32.gmra.mrb[0].mxu0 %v208
    %v509 = vpop.f32.mrb[0].mxu0
    %v510 = vadd.f32 0.0, %v509
    %v511 = vpop.f32.mrb[0].mxu0
    %v512 = vadd.f32 0.0, %v511
    %513 = vmatprep.mubr.f32.mxu0 0.0
    %514 = vmatmul.mubr.f32.gmra.mrb[0].mxu0 %v211
    %v515 = vpop.f32.mrb[0].mxu0
    %v516 = vadd.f32 0.0, %v515
    %v517 = vpop.f32.mrb[0].mxu0
    %v518 = vadd.f32 0.0, %v517
    %519 = vmatprep.mubr.f32.mxu0 0.0
    %520 = vmatmul.mubr.f32.gmra.mrb[0].mxu0 %v214
    %v521 = vpop.f32.mrb[0].mxu0
    %v522 = vadd.f32 0.0, %v521
    %v523 = vpop.f32.mrb[0].mxu0
    %v524 = vadd.f32 0.0, %v523
    %525 = vmatprep.mubr.f32.mxu0 0.0
    %526 = vmatmul.mubr.f32.gmra.mrb[0].mxu0 %v217
    %v527 = vpop.f32.mrb[0].mxu0
    %v528 = vadd.f32 0.0, %v527
    %v529 = vpop.f32.mrb[0].mxu0
    %v530 = vadd.f32 0.0, %v529
    %531 = vmatprep.mubr.f32.mxu0 0.0
    %532 = vmatmul.mubr.f32.gmra.mrb[0].mxu0 %v220
    %v533 = vpop.f32.mrb[0].mxu0
    %v534 = vadd.f32 0.0, %v533
    %v535 = vpop.f32.mrb[0].mxu0
    %v536 = vadd.f32 0.0, %v535
    %537 = vmatprep.mubr.f32.mxu0 0.0
    %538 = vmatmul.mubr.f32.gmra.mrb[0].mxu0 %v223
    %v539 = vpop.f32.mrb[0].mxu0
    %v540 = vadd.f32 0.0, %v539
    %v541 = vpop.f32.mrb[0].mxu0
    %v542 = vadd.f32 0.0, %v541
    %543 = vmatprep.mubr.f32.mxu0 0.0
    %544 = vmatmul.mubr.f32.gmra.mrb[0].mxu0 %v226
    %v545 = vpop.f32.mrb[0].mxu0
    %v546 = vadd.f32 0.0, %v545
    %v547 = vpop.f32.mrb[0].mxu0
    %v548 = vadd.f32 0.0, %v547
    %549 = vdwg.mxu0
    %v550 = vadd.f32 %v83, %v295
    %v551 = vadd.f32 %v84, %v297
    %v552 = vadd.f32 %v85, %v456
    %v553 = vadd.f32 %v86, %v458
    %v554 = vadd.f32 %v87, %v301
    %v555 = vadd.f32 %v88, %v303
    %v556 = vadd.f32 %v89, %v462
    %v557 = vadd.f32 %v90, %v464
    %v558 = vadd.f32 %v91, %v307
    %v559 = vadd.f32 %v92, %v309
    %v560 = vadd.f32 %v93, %v468
    %v561 = vadd.f32 %v94, %v470
    %v562 = vadd.f32 %v95, %v313
    %v563 = vadd.f32 %v96, %v315
    %v564 = vadd.f32 %v97, %v474
    %v565 = vadd.f32 %v98, %v476
    %v566 = vadd.f32 %v99, %v319
    %v567 = vadd.f32 %v100, %v321
    %v568 = vadd.f32 %v101, %v480
    %v569 = vadd.f32 %v102, %v482
    %v570 = vadd.f32 %v103, %v325
    %v571 = vadd.f32 %v104, %v327
    %v572 = vadd.f32 %v105, %v486
    %v573 = vadd.f32 %v106, %v488
    %v574 = vadd.f32 %v107, %v331
    %v575 = vadd.f32 %v108, %v333
    %v576 = vadd.f32 %v109, %v492
    %v577 = vadd.f32 %v110, %v494
    %v578 = vadd.f32 %v111, %v337
    %v579 = vadd.f32 %v112, %v339
    %v580 = vadd.f32 %v113, %v498
    %v581 = vadd.f32 %v114, %v500
    %v582 = vadd.f32 %v115, %v343
    %v583 = vadd.f32 %v116, %v345
    %v584 = vadd.f32 %v117, %v504
    %v585 = vadd.f32 %v118, %v506
    %v586 = vadd.f32 %v119, %v349
    %v587 = vadd.f32 %v120, %v351
    %v588 = vadd.f32 %v121, %v510
    %v589 = vadd.f32 %v122, %v512
    %v590 = vadd.f32 %v123, %v355
    %v591 = vadd.f32 %v124, %v357
    %v592 = vadd.f32 %v125, %v516
    %v593 = vadd.f32 %v126, %v518
    %v594 = vadd.f32 %v127, %v361
    %v595 = vadd.f32 %v128, %v363
    %v596 = vadd.f32 %v129, %v522
    %v597 = vadd.f32 %v130, %v524
    %v598 = vadd.f32 %v131, %v367
    %v599 = vadd.f32 %v132, %v369
    %v600 = vadd.f32 %v133, %v528
    %v601 = vadd.f32 %v134, %v530
    %v602 = vadd.f32 %v135, %v373
    %v603 = vadd.f32 %v136, %v375
    %v604 = vadd.f32 %v137, %v534
    %v605 = vadd.f32 %v138, %v536
    %v606 = vadd.f32 %v139, %v379
    %v607 = vadd.f32 %v140, %v381
    %v608 = vadd.f32 %v141, %v540
    %v609 = vadd.f32 %v142, %v542
    %v610 = vadd.f32 %v143, %v385
    %v611 = vadd.f32 %v144, %v387
    %v612 = vadd.f32 %v145, %v546
    %v613 = vadd.f32 %v146, %v548
    %614 = vst [vmem:[#allocation2] sm:$0xff] %v550
    %615 = vst [vmem:[#allocation2 + $0x8] sm:$0xff] %v551
    %616 = vst [vmem:[#allocation2 + $0x10] sm:$0xff] %v552
    %617 = vst [vmem:[#allocation2 + $0x18] sm:$0xff] %v553
    %618 = vst [vmem:[#allocation2 + $0x20] sm:$0xff] %v554
    %619 = vst [vmem:[#allocation2 + $0x28] sm:$0xff] %v555
    %620 = vst [vmem:[#allocation2 + $0x30] sm:$0xff] %v556
    %621 = vst [vmem:[#allocation2 + $0x38] sm:$0xff] %v557
    %622 = vst [vmem:[#allocation2 + $0x40] sm:$0xff] %v558
    %623 = vst [vmem:[#allocation2 + $0x48] sm:$0xff] %v559
    %624 = vst [vmem:[#allocation2 + $0x50] sm:$0xff] %v560
    %625 = vst [vmem:[#allocation2 + $0x58] sm:$0xff] %v561
    %626 = vst [vmem:[#allocation2 + $0x60] sm:$0xff] %v562
    %627 = vst [vmem:[#allocation2 + $0x68] sm:$0xff] %v563
    %628 = vst [vmem:[#allocation2 + $0x70] sm:$0xff] %v564
    %629 = vst [vmem:[#allocation2 + $0x78] sm:$0xff] %v565
    %630 = vst [vmem:[#allocation2 + $0x80] sm:$0xff] %v566
    %631 = vst [vmem:[#allocation2 + $0x88] sm:$0xff] %v567
    %632 = vst [vmem:[#allocation2 + $0x90] sm:$0xff] %v568
    %633 = vst [vmem:[#allocation2 + $0x98] sm:$0xff] %v569
    %634 = vst [vmem:[#allocation2 + $0xa0] sm:$0xff] %v570
    %635 = vst [vmem:[#allocation2 + $0xa8] sm:$0xff] %v571
    %636 = vst [vmem:[#allocation2 + $0xb0] sm:$0xff] %v572
    %637 = vst [vmem:[#allocation2 + $0xb8] sm:$0xff] %v573
    %638 = vst [vmem:[#allocation2 + $0xc0] sm:$0xff] %v574
    %639 = vst [vmem:[#allocation2 + $0xc8] sm:$0xff] %v575
    %640 = vst [vmem:[#allocation2 + $0xd0] sm:$0xff] %v576
    %641 = vst [vmem:[#allocation2 + $0xd8] sm:$0xff] %v577
    %642 = vst [vmem:[#allocation2 + $0xe0] sm:$0xff] %v578
    %643 = vst [vmem:[#allocation2 + $0xe8] sm:$0xff] %v579
    %644 = vst [vmem:[#allocation2 + $0xf0] sm:$0xff] %v580
    %645 = vst [vmem:[#allocation2 + $0xf8] sm:$0xff] %v581
    %646 = vst [vmem:[#allocation2 + $0x100] sm:$0xff] %v582
    %647 = vst [vmem:[#allocation2 + $0x108] sm:$0xff] %v583
    %648 = vst [vmem:[#allocation2 + $0x110] sm:$0xff] %v584
    %649 = vst [vmem:[#allocation2 + $0x118] sm:$0xff] %v585
    %650 = vst [vmem:[#allocation2 + $0x120] sm:$0xff] %v586
    %651 = vst [vmem:[#allocation2 + $0x128] sm:$0xff] %v587
    %652 = vst [vmem:[#allocation2 + $0x130] sm:$0xff] %v588
    %653 = vst [vmem:[#allocation2 + $0x138] sm:$0xff] %v589
    %654 = vst [vmem:[#allocation2 + $0x140] sm:$0xff] %v590
    %655 = vst [vmem:[#allocation2 + $0x148] sm:$0xff] %v591
    %656 = vst [vmem:[#allocation2 + $0x150] sm:$0xff] %v592
    %657 = vst [vmem:[#allocation2 + $0x158] sm:$0xff] %v593
    %658 = vst [vmem:[#allocation2 + $0x160] sm:$0xff] %v594
    %659 = vst [vmem:[#allocation2 + $0x168] sm:$0xff] %v595
    %660 = vst [vmem:[#allocation2 + $0x170] sm:$0xff] %v596
    %661 = vst [vmem:[#allocation2 + $0x178] sm:$0xff] %v597
    %662 = vst [vmem:[#allocation2 + $0x180] sm:$0xff] %v598
    %663 = vst [vmem:[#allocation2 + $0x188] sm:$0xff] %v599
    %664 = vst [vmem:[#allocation2 + $0x190] sm:$0xff] %v600
    %665 = vst [vmem:[#allocation2 + $0x198] sm:$0xff] %v601
    %666 = vst [vmem:[#allocation2 + $0x1a0] sm:$0xff] %v602
    %667 = vst [vmem:[#allocation2 + $0x1a8] sm:$0xff] %v603
    %668 = vst [vmem:[#allocation2 + $0x1b0] sm:$0xff] %v604
    %669 = vst [vmem:[#allocation2 + $0x1b8] sm:$0xff] %v605
    %670 = vst [vmem:[#allocation2 + $0x1c0] sm:$0xff] %v606
    %671 = vst [vmem:[#allocation2 + $0x1c8] sm:$0xff] %v607
    %672 = vst [vmem:[#allocation2 + $0x1d0] sm:$0xff] %v608
    %673 = vst [vmem:[#allocation2 + $0x1d8] sm:$0xff] %v609
    %674 = vst [vmem:[#allocation2 + $0x1e0] sm:$0xff] %v610
    %675 = vst [vmem:[#allocation2 + $0x1e8] sm:$0xff] %v611
    %676 = vst [vmem:[#allocation2 + $0x1f0] sm:$0xff] %v612
    %677 = vst [vmem:[#allocation2 + $0x1f8] sm:$0xff] %v613
    // Predicated region
    $region18: #{tpu_custom_call.1} parent=1 // pred_check
      %p678 = pneg %p15
    $region19: #{tpu_custom_call.1} parent=1 // pred_check_branch
      %680 = sbr.rel (%p678) target = $region21
    $region20: #{tpu_custom_call.1} parent=1 // pred_region
      %v681 = vld [vmem:[#allocation2] sm:$0xff]
      %v682 = vld [vmem:[#allocation2 + $0x8] sm:$0xff]
      %v683 = vld [vmem:[#allocation2 + $0x10] sm:$0xff]
      %v684 = vld [vmem:[#allocation2 + $0x18] sm:$0xff]
      %v685 = vld [vmem:[#allocation2 + $0x20] sm:$0xff]
      %v686 = vld [vmem:[#allocation2 + $0x28] sm:$0xff]
      %v687 = vld [vmem:[#allocation2 + $0x30] sm:$0xff]
      %v688 = vld [vmem:[#allocation2 + $0x38] sm:$0xff]
      %v689 = vld [vmem:[#allocation2 + $0x40] sm:$0xff]
      %v690 = vld [vmem:[#allocation2 + $0x48] sm:$0xff]
      %v691 = vld [vmem:[#allocation2 + $0x50] sm:$0xff]
      %v692 = vld [vmem:[#allocation2 + $0x58] sm:$0xff]
      %v693 = vld [vmem:[#allocation2 + $0x60] sm:$0xff]
      %v694 = vld [vmem:[#allocation2 + $0x68] sm:$0xff]
      %v695 = vld [vmem:[#allocation2 + $0x70] sm:$0xff]
      %v696 = vld [vmem:[#allocation2 + $0x78] sm:$0xff]
      %v697 = vld [vmem:[#allocation2 + $0x80] sm:$0xff]
      %v698 = vld [vmem:[#allocation2 + $0x88] sm:$0xff]
      %v699 = vld [vmem:[#allocation2 + $0x90] sm:$0xff]
      %v700 = vld [vmem:[#allocation2 + $0x98] sm:$0xff]
      %v701 = vld [vmem:[#allocation2 + $0xa0] sm:$0xff]
      %v702 = vld [vmem:[#allocation2 + $0xa8] sm:$0xff]
      %v703 = vld [vmem:[#allocation2 + $0xb0] sm:$0xff]
      %v704 = vld [vmem:[#allocation2 + $0xb8] sm:$0xff]
      %v705 = vld [vmem:[#allocation2 + $0xc0] sm:$0xff]
      %v706 = vld [vmem:[#allocation2 + $0xc8] sm:$0xff]
      %v707 = vld [vmem:[#allocation2 + $0xd0] sm:$0xff]
      %v708 = vld [vmem:[#allocation2 + $0xd8] sm:$0xff]
      %v709 = vld [vmem:[#allocation2 + $0xe0] sm:$0xff]
      %v710 = vld [vmem:[#allocation2 + $0xe8] sm:$0xff]
      %v711 = vld [vmem:[#allocation2 + $0xf0] sm:$0xff]
      %v712 = vld [vmem:[#allocation2 + $0xf8] sm:$0xff]
      %v713 = vld [vmem:[#allocation2 + $0x100] sm:$0xff]
      %v714 = vld [vmem:[#allocation2 + $0x108] sm:$0xff]
      %v715 = vld [vmem:[#allocation2 + $0x110] sm:$0xff]
      %v716 = vld [vmem:[#allocation2 + $0x118] sm:$0xff]
      %v717 = vld [vmem:[#allocation2 + $0x120] sm:$0xff]
      %v718 = vld [vmem:[#allocation2 + $0x128] sm:$0xff]
      %v719 = vld [vmem:[#allocation2 + $0x130] sm:$0xff]
      %v720 = vld [vmem:[#allocation2 + $0x138] sm:$0xff]
      %v721 = vld [vmem:[#allocation2 + $0x140] sm:$0xff]
      %v722 = vld [vmem:[#allocation2 + $0x148] sm:$0xff]
      %v723 = vld [vmem:[#allocation2 + $0x150] sm:$0xff]
      %v724 = vld [vmem:[#allocation2 + $0x158] sm:$0xff]
      %v725 = vld [vmem:[#allocation2 + $0x160] sm:$0xff]
      %v726 = vld [vmem:[#allocation2 + $0x168] sm:$0xff]
      %v727 = vld [vmem:[#allocation2 + $0x170] sm:$0xff]
      %v728 = vld [vmem:[#allocation2 + $0x178] sm:$0xff]
      %v729 = vld [vmem:[#allocation2 + $0x180] sm:$0xff]
      %v730 = vld [vmem:[#allocation2 + $0x188] sm:$0xff]
      %v731 = vld [vmem:[#allocation2 + $0x190] sm:$0xff]
      %v732 = vld [vmem:[#allocation2 + $0x198] sm:$0xff]
      %v733 = vld [vmem:[#allocation2 + $0x1a0] sm:$0xff]
      %v734 = vld [vmem:[#allocation2 + $0x1a8] sm:$0xff]
      %v735 = vld [vmem:[#allocation2 + $0x1b0] sm:$0xff]
      %v736 = vld [vmem:[#allocation2 + $0x1b8] sm:$0xff]
      %v737 = vld [vmem:[#allocation2 + $0x1c0] sm:$0xff]
      %v738 = vld [vmem:[#allocation2 + $0x1c8] sm:$0xff]
      %v739 = vld [vmem:[#allocation2 + $0x1d0] sm:$0xff]
      %v740 = vld [vmem:[#allocation2 + $0x1d8] sm:$0xff]
      %v741 = vld [vmem:[#allocation2 + $0x1e0] sm:$0xff]
      %v742 = vld [vmem:[#allocation2 + $0x1e8] sm:$0xff]
      %v743 = vld [vmem:[#allocation2 + $0x1f0] sm:$0xff]
      %v744 = vld [vmem:[#allocation2 + $0x1f8] sm:$0xff]
      %v745 = vld [vmem:[%s2] sm:$0xf]
      %v747 = vlaneseq
      %v748 = vshrl.u32 %v747, 7
      %v749 = vsub.s32 0, %v748
      %v750 = vrot.slane %v745, %v749
      %v751 = vlaneseq
      %v752 = vshrl.u32 %v751, 7
      %v753 = vsub.s32 1, %v752
      %v754 = vrot.slane %v745, %v753
      %v755 = vlaneseq
      %v756 = vshrl.u32 %v755, 7
      %v757 = vsub.s32 2, %v756
      %v758 = vrot.slane %v745, %v757
      %v759 = vlaneseq
      %v760 = vshrl.u32 %v759, 7
      %v761 = vsub.s32 3, %v760
      %v762 = vrot.slane %v745, %v761
      %v767 = vadd.f32 %v681, %v750
      %v768 = vadd.f32 %v682, %v754
      %v769 = vadd.f32 %v683, %v758
      %v770 = vadd.f32 %v684, %v762
      %v771 = vadd.f32 %v685, %v750
      %v772 = vadd.f32 %v686, %v754
      %v773 = vadd.f32 %v687, %v758
      %v774 = vadd.f32 %v688, %v762
      %v775 = vadd.f32 %v689, %v750
      %v776 = vadd.f32 %v690, %v754
      %v777 = vadd.f32 %v691, %v758
      %v778 = vadd.f32 %v692, %v762
      %v779 = vadd.f32 %v693, %v750
      %v780 = vadd.f32 %v694, %v754
      %v781 = vadd.f32 %v695, %v758
      %v782 = vadd.f32 %v696, %v762
      %v783 = vadd.f32 %v697, %v750
      %v784 = vadd.f32 %v698, %v754
      %v785 = vadd.f32 %v699, %v758
      %v786 = vadd.f32 %v700, %v762
      %v787 = vadd.f32 %v701, %v750
      %v788 = vadd.f32 %v702, %v754
      %v789 = vadd.f32 %v703, %v758
      %v790 = vadd.f32 %v704, %v762
      %v791 = vadd.f32 %v705, %v750
      %v792 = vadd.f32 %v706, %v754
      %v793 = vadd.f32 %v707, %v758
      %v794 = vadd.f32 %v708, %v762
      %v795 = vadd.f32 %v709, %v750
      %v796 = vadd.f32 %v710, %v754
      %v797 = vadd.f32 %v711, %v758
      %v798 = vadd.f32 %v712, %v762
      %v799 = vadd.f32 %v713, %v750
      %v800 = vadd.f32 %v714, %v754
      %v801 = vadd.f32 %v715, %v758
      %v802 = vadd.f32 %v716, %v762
      %v803 = vadd.f32 %v717, %v750
      %v804 = vadd.f32 %v718, %v754
      %v805 = vadd.f32 %v719, %v758
      %v806 = vadd.f32 %v720, %v762
      %v807 = vadd.f32 %v721, %v750
      %v808 = vadd.f32 %v722, %v754
      %v809 = vadd.f32 %v723, %v758
      %v810 = vadd.f32 %v724, %v762
      %v811 = vadd.f32 %v725, %v750
      %v812 = vadd.f32 %v726, %v754
      %v813 = vadd.f32 %v727, %v758
      %v814 = vadd.f32 %v728, %v762
      %v815 = vadd.f32 %v729, %v750
      %v816 = vadd.f32 %v730, %v754
      %v817 = vadd.f32 %v731, %v758
      %v818 = vadd.f32 %v732, %v762
      %v819 = vadd.f32 %v733, %v750
      %v820 = vadd.f32 %v734, %v754
      %v821 = vadd.f32 %v735, %v758
      %v822 = vadd.f32 %v736, %v762
      %v823 = vadd.f32 %v737, %v750
      %v824 = vadd.f32 %v738, %v754
      %v825 = vadd.f32 %v739, %v758
      %v826 = vadd.f32 %v740, %v762
      %v827 = vadd.f32 %v741, %v750
      %v828 = vadd.f32 %v742, %v754
      %v829 = vadd.f32 %v743, %v758
      %v830 = vadd.f32 %v744, %v762
      %831 = vst [vmem:[#allocation2] sm:$0xff] %v767
      %832 = vst [vmem:[#allocation2 + $0x8] sm:$0xff] %v768
      %833 = vst [vmem:[#allocation2 + $0x10] sm:$0xff] %v769
      %834 = vst [vmem:[#allocation2 + $0x18] sm:$0xff] %v770
      %835 = vst [vmem:[#allocation2 + $0x20] sm:$0xff] %v771
      %836 = vst [vmem:[#allocation2 + $0x28] sm:$0xff] %v772
      %837 = vst [vmem:[#allocation2 + $0x30] sm:$0xff] %v773
      %838 = vst [vmem:[#allocation2 + $0x38] sm:$0xff] %v774
      %839 = vst [vmem:[#allocation2 + $0x40] sm:$0xff] %v775
      %840 = vst [vmem:[#allocation2 + $0x48] sm:$0xff] %v776
      %841 = vst [vmem:[#allocation2 + $0x50] sm:$0xff] %v777
      %842 = vst [vmem:[#allocation2 + $0x58] sm:$0xff] %v778
      %843 = vst [vmem:[#allocation2 + $0x60] sm:$0xff] %v779
      %844 = vst [vmem:[#allocation2 + $0x68] sm:$0xff] %v780
      %845 = vst [vmem:[#allocation2 + $0x70] sm:$0xff] %v781
      %846 = vst [vmem:[#allocation2 + $0x78] sm:$0xff] %v782
      %847 = vst [vmem:[#allocation2 + $0x80] sm:$0xff] %v783
      %848 = vst [vmem:[#allocation2 + $0x88] sm:$0xff] %v784
      %849 = vst [vmem:[#allocation2 + $0x90] sm:$0xff] %v785
      %850 = vst [vmem:[#allocation2 + $0x98] sm:$0xff] %v786
      %851 = vst [vmem:[#allocation2 + $0xa0] sm:$0xff] %v787
      %852 = vst [vmem:[#allocation2 + $0xa8] sm:$0xff] %v788
      %853 = vst [vmem:[#allocation2 + $0xb0] sm:$0xff] %v789
      %854 = vst [vmem:[#allocation2 + $0xb8] sm:$0xff] %v790
      %855 = vst [vmem:[#allocation2 + $0xc0] sm:$0xff] %v791
      %856 = vst [vmem:[#allocation2 + $0xc8] sm:$0xff] %v792
      %857 = vst [vmem:[#allocation2 + $0xd0] sm:$0xff] %v793
      %858 = vst [vmem:[#allocation2 + $0xd8] sm:$0xff] %v794
      %859 = vst [vmem:[#allocation2 + $0xe0] sm:$0xff] %v795
      %860 = vst [vmem:[#allocation2 + $0xe8] sm:$0xff] %v796
      %861 = vst [vmem:[#allocation2 + $0xf0] sm:$0xff] %v797
      %862 = vst [vmem:[#allocation2 + $0xf8] sm:$0xff] %v798
      %863 = vst [vmem:[#allocation2 + $0x100] sm:$0xff] %v799
      %864 = vst [vmem:[#allocation2 + $0x108] sm:$0xff] %v800
      %865 = vst [vmem:[#allocation2 + $0x110] sm:$0xff] %v801
      %866 = vst [vmem:[#allocation2 + $0x118] sm:$0xff] %v802
      %867 = vst [vmem:[#allocation2 + $0x120] sm:$0xff] %v803
      %868 = vst [vmem:[#allocation2 + $0x128] sm:$0xff] %v804
      %869 = vst [vmem:[#allocation2 + $0x130] sm:$0xff] %v805
      %870 = vst [vmem:[#allocation2 + $0x138] sm:$0xff] %v806
      %871 = vst [vmem:[#allocation2 + $0x140] sm:$0xff] %v807
      %872 = vst [vmem:[#allocation2 + $0x148] sm:$0xff] %v808
      %873 = vst [vmem:[#allocation2 + $0x150] sm:$0xff] %v809
      %874 = vst [vmem:[#allocation2 + $0x158] sm:$0xff] %v810
      %875 = vst [vmem:[#allocation2 + $0x160] sm:$0xff] %v811
      %876 = vst [vmem:[#allocation2 + $0x168] sm:$0xff] %v812
      %877 = vst [vmem:[#allocation2 + $0x170] sm:$0xff] %v813
      %878 = vst [vmem:[#allocation2 + $0x178] sm:$0xff] %v814
      %879 = vst [vmem:[#allocation2 + $0x180] sm:$0xff] %v815
      %880 = vst [vmem:[#allocation2 + $0x188] sm:$0xff] %v816
      %881 = vst [vmem:[#allocation2 + $0x190] sm:$0xff] %v817
      %882 = vst [vmem:[#allocation2 + $0x198] sm:$0xff] %v818
      %883 = vst [vmem:[#allocation2 + $0x1a0] sm:$0xff] %v819
      %884 = vst [vmem:[#allocation2 + $0x1a8] sm:$0xff] %v820
      %885 = vst [vmem:[#allocation2 + $0x1b0] sm:$0xff] %v821
      %886 = vst [vmem:[#allocation2 + $0x1b8] sm:$0xff] %v822
      %887 = vst [vmem:[#allocation2 + $0x1c0] sm:$0xff] %v823
      %888 = vst [vmem:[#allocation2 + $0x1c8] sm:$0xff] %v824
      %889 = vst [vmem:[#allocation2 + $0x1d0] sm:$0xff] %v825
      %890 = vst [vmem:[#allocation2 + $0x1d8] sm:$0xff] %v826
      %891 = vst [vmem:[#allocation2 + $0x1e0] sm:$0xff] %v827
      %892 = vst [vmem:[#allocation2 + $0x1e8] sm:$0xff] %v828
      %893 = vst [vmem:[#allocation2 + $0x1f0] sm:$0xff] %v829
      %894 = vst [vmem:[#allocation2 + $0x1f8] sm:$0xff] %v830
    $region21: #{tpu_custom_call.1} parent=1 // pred_fallthru
      _
    // Predicated region
    $region22: #{tpu_custom_call.1} parent=1 // pred_check
      _
    $region23: #{tpu_custom_call.1} parent=1 // pred_check_branch
      %896 = sbr.rel (0) target = $region25
    $region24: #{tpu_custom_call.1} parent=1 // pred_region
      %s898 = ssub.s32 8192, 8192
      %899 = vsyncadd [#allocation3], %s898
      %s900 = sshll.u32 [#allocation2], 4
      %s901 = int_to_ptr.vmem [resolvable:$true] %s900
      %906 = dma.vmem_to_hbm [thread:$0]  %s901, 8192, %s3, [#allocation3], 512, 512, 32
    $region25: #{tpu_custom_call.1} parent=1 // pred_fallthru
      _
    // Predicated region
    $region26: #{tpu_custom_call.1} parent=1 // pred_check
      _
    $region27: #{tpu_custom_call.1} parent=1 // pred_check_branch
      %908 = sbr.rel (0) target = $region29
    $region28: #{tpu_custom_call.1} parent=1 // pred_region
      %909 = dma.done [#allocation3], 8192
    $region29: #{tpu_custom_call.1} parent=1 // pred_fallthru
      _
    %910 = vsyncpa [#allocation3], 1

</llo_original>
